<compile_context>
chip_gen: v5e
topology: v5e:2x2
jax: 0.10.0
libtpu: 0.0.40
codegen_flags: <defaults>
</compile_context>

<pallas_src>
import functools

import jax
import jax.numpy as jnp
from jax.experimental import pallas as pl
from jax.experimental.pallas import tpu as pltpu


C_PAD = 128  # lane-dense padded class dimension


def _round_up(x, m):
    return ((x + m - 1) // m) * m


# ---------------------------------------------------------------------------
# Fused kernel, one grid step per TN-row tile of the flattened activations.
#   x_ref    : [TN, H]     native-dtype word representations (cast to bf16 here)
#   w_ref    : [H, 128]    bf16 output_layer weight, zero-padded past labels_num
#   b_ref    : [1, 128]    f32 bias, -1e30 in the phantom class lanes
#   tgt_ref  : [TN, 1]     int32 labels
#   seg_ref  : [TN, 1]     int32 segment mask
# outputs (all lane-dense):
#   pred_ref : [1, 1, TN]  int32 argmax over real classes
#   num_ref  : [1, 1, 128] f32, per-tile  sum(seg * CE)  broadcast over lanes
#   den_ref  : [1, 1, 128] f32, per-tile  sum(seg)       broadcast over lanes
# ---------------------------------------------------------------------------
def _ner_loss_kernel(x_ref, w_ref, b_ref, tgt_ref, seg_ref,
                     pred_ref, num_ref, den_ref, *, n_tokens):
    tn = x_ref.shape[0]
    c_pad = w_ref.shape[1]

    # MXU: bf16 operands (cast in-kernel), f32 accumulation.
    logits = jnp.dot(x_ref[...].astype(jnp.bfloat16), w_ref[...],
                     preferred_element_type=jnp.float32) + b_ref[...]     # [TN,128]

    cls = jax.lax.broadcasted_iota(jnp.int32, (tn, c_pad), 1)

    # CE = m + lse - target_logit (no logp / one-hot temporaries). Phantom
    # lanes (-1e30 bias) contribute exp(-huge) == 0 to the LSE.
    m = jnp.max(logits, axis=-1, keepdims=True)                           # [TN,1]
    lse = jnp.log(jnp.sum(jnp.exp(logits - m), axis=-1, keepdims=True))   # [TN,1]
    tgt_logit = jnp.sum(jnp.where(cls == tgt_ref[...], logits, 0.0),
                        axis=-1, keepdims=True)                           # [TN,1]
    ce = m + lse - tgt_logit                                              # [TN,1]

    # Ragged-tail row mask (n_tokens is a static Python int); fold the seg
    # mask and the loss reductions into per-tile partial sums so the per-token
    # CE never touches HBM.
    row = (pl.program_id(0) * tn
           + jax.lax.broadcasted_iota(jnp.int32, (tn, 1), 0))
    valid = row < n_tokens
    seg_f = jnp.where(valid, seg_ref[...].astype(jnp.float32), 0.0)
    contrib = jnp.where(valid, seg_f * ce, 0.0)
    num_ref[0] = jnp.broadcast_to(
        jnp.sum(contrib, axis=0, keepdims=True), (1, c_pad))
    den_ref[0] = jnp.broadcast_to(
        jnp.sum(seg_f, axis=0, keepdims=True), (1, c_pad))

    # Argmax (ties -> lowest index); phantom lanes can never win. Emit it
    # lane-dense: exclusive one-hot of the winning class, then a tiny NT
    # matmul against a lane-index vector gives a [1, TN] row, so the pred
    # store is an unmasked, lane-dense vst instead of a vst.msk column.
    idx = jnp.where(logits == m, cls, c_pad)
    pred_col = jnp.min(idx, axis=-1, keepdims=True)                       # [TN,1]
    onehot = (cls == pred_col).astype(jnp.bfloat16)                       # [TN,128]
    lane_f = jax.lax.broadcasted_iota(
        jnp.int32, (1, c_pad), 1).astype(jnp.bfloat16)                    # [1,128]
    pred_row = jax.lax.dot_general(
        lane_f, onehot, (((1,), (1,)), ((), ())),
        preferred_element_type=jnp.float32)                               # [1,TN]
    pred_ref[0] = pred_row.astype(jnp.int32)


# ---------------------------------------------------------------------------
# Wrapper: picks tiles, launches the fused kernel, finishes the scalar math.
# ---------------------------------------------------------------------------
@functools.partial(jax.jit, static_argnames=("tile_n",))
def ner_tagger_forward(word_repr, w_out, b_out, tgt, seg, *, tile_n=1024):
    """Non-CRF training branch of NerTagger: returns (loss, pred)."""
    B, S, H = word_repr.shape
    labels_num = w_out.shape[-1]
    N = B * S

    # Tile size: multiple of 8 sublanes, capped so grid_n >= 2 when possible
    # (keeps both v7x TensorCores busy); ragged tail handled in-kernel.
    half = _round_up(pl.cdiv(N, 2), 8)
    tn = max(8, min(_round_up(tile_n, 8), half))
    grid_n = pl.cdiv(N, tn)
    n_pad = grid_n * tn

    # Free reshapes only — no cast, no pad of the big activation.
    x = word_repr.reshape(N, H)
    tgt_col = tgt.reshape(N, 1).astype(jnp.int32)
    seg_col = seg.reshape(N, 1).astype(jnp.int32)

    # Pad the tiny class dim to a full 128-lane tile (weights are tiny).
    w_pad = jnp.zeros((H, C_PAD), jnp.bfloat16).at[:, :labels_num].set(
        w_out.astype(jnp.bfloat16))
    b_pad = jnp.full((1, C_PAD), -1e30, jnp.float32).at[0, :labels_num].set(
        b_out.astype(jnp.float32))

    kernel = functools.partial(_ner_loss_kernel, n_tokens=N)

    pred3, num3, den3 = pl.pallas_call(
        kernel,
        out_shape=(jax.ShapeDtypeStruct((grid_n, 1, tn), jnp.int32),
                   jax.ShapeDtypeStruct((grid_n, 1, C_PAD), jnp.float32),
                   jax.ShapeDtypeStruct((grid_n, 1, C_PAD), jnp.float32)),
        grid=(grid_n,),
        in_specs=[
            pl.BlockSpec((tn, H), lambda i: (i, 0)),        # x tile (streamed once)
            pl.BlockSpec((H, C_PAD), lambda i: (0, 0)),     # W (resident)
            pl.BlockSpec((1, C_PAD), lambda i: (0, 0)),     # bias (resident)
            pl.BlockSpec((tn, 1), lambda i: (i, 0)),        # labels tile
            pl.BlockSpec((tn, 1), lambda i: (i, 0)),        # seg tile
        ],
        out_specs=(
            pl.BlockSpec((1, 1, tn), lambda i: (i, 0, 0)),      # lane-dense pred
            pl.BlockSpec((1, 1, C_PAD), lambda i: (i, 0, 0)),   # partial numerator
            pl.BlockSpec((1, 1, C_PAD), lambda i: (i, 0, 0)),   # partial denominator
        ),
        compiler_params=pltpu.CompilerParams(
            dimension_semantics=("parallel",)),             # shard across TCs
    )(x, w_pad, b_pad, tgt_col, seg_col)

    pred = pred3.reshape(n_pad)[:N]
    numerator = jnp.sum(num3[:, 0, 0])
    denominator = jnp.sum(den3[:, 0, 0]) + 1e-6
    loss = numerator / denominator
    return loss, pred


# ---------------------------------------------------------------------------
# Pure-JAX reference (matches the kernel's bf16 operand rounding).
# ---------------------------------------------------------------------------
def _reference_forward(word_repr, w_out, b_out, tgt, seg, labels_num):
    B, S, H = word_repr.shape
    x = word_repr.reshape(B * S, H).astype(jnp.bfloat16).astype(jnp.float32)
    w = w_out.astype(jnp.bfloat16).astype(jnp.float32)
    logits = x @ w + b_out.astype(jnp.float32)
    logp = jax.nn.log_softmax(logits, axis=-1)
    onehot = jax.nn.one_hot(tgt.reshape(-1), labels_num, dtype=jnp.float32)
    ce = -jnp.sum(logp * onehot, axis=-1)
    mask = seg.reshape(-1).astype(jnp.float32)
    loss = jnp.sum(mask * ce) / (jnp.sum(mask) + 1e-6)
    pred = jnp.argmax(logits, axis=-1)
    return loss, pred


if __name__ == "__main__":
    # Small synthetic configuration consistent with the module.
    B, S, H = 2, 8, 32
    VOCAB = 50
    LABELS = 5

    key = jax.random.PRNGKey(0)
    (k_emb, k_enc_w, k_enc_b, k_out_w, k_out_b,
     k_src, k_tgt) = jax.random.split(key, 7)

    # ---- inputs the real module receives ----
    src = jax.random.randint(k_src, (B, S), 0, VOCAB)
    seg = jnp.array([[1, 1, 1, 1, 1, 1, 0, 0],
                     [1, 1, 1, 1, 1, 1, 1, 1]], dtype=jnp.int32)
    tgt = jax.random.randint(k_tgt, (B, S), 0, LABELS)

    # ---- deterministic stand-in embedding + encoder (plain JAX glue) ----
    # TODO(synk): replace with the real str2embedding / str2encoder stack.
    emb_table = jax.random.normal(k_emb, (VOCAB, H), dtype=jnp.float32) * 0.1
    w_enc = jax.random.normal(k_enc_w, (H, H), dtype=jnp.float32) * 0.1
    b_enc = jax.random.normal(k_enc_b, (H,), dtype=jnp.float32) * 0.01
    word_repr = jnp.tanh(emb_table[src] @ w_enc + b_enc)        # [B, S, H]

    # ---- output_layer parameters ----
    w_out = jax.random.normal(k_out_w, (H, LABELS), dtype=jnp.float32) * 0.1
    b_out = jax.random.normal(k_out_b, (LABELS,), dtype=jnp.float32) * 0.01

    # ---- run fused Pallas kernel (N=16 -> tn=8, 2 grid steps) ----
    loss, pred = ner_tagger_forward(word_repr, w_out, b_out, tgt, seg)
    loss = jax.block_until_ready(loss)

    # ---- verify against pure-JAX reference ----
    ref_loss, ref_pred = _reference_forward(word_repr, w_out, b_out, tgt, seg,
                                            LABELS)
    assert jnp.allclose(loss, ref_loss, rtol=1e-3, atol=1e-3), (loss, ref_loss)
    assert jnp.array_equal(pred, ref_pred), (pred, ref_pred)

    print("KERNEL_OK")
</pallas_src>

<mosaic_0001>
module attributes {stable_mosaic.version = 11 : i64} {
  func.func @_ner_loss_kernel(%arg0: i32, %arg1: memref<8x32xf32, #tpu.memory_space<vmem>>, %arg2: memref<32x128xbf16, #tpu.memory_space<vmem>>, %arg3: memref<1x128xf32, #tpu.memory_space<vmem>>, %arg4: memref<8x1xi32, #tpu.memory_space<vmem>>, %arg5: memref<8x1xi32, #tpu.memory_space<vmem>>, %arg6: memref<1x1x8xi32, #tpu.memory_space<vmem>>, %arg7: memref<1x1x128xf32, #tpu.memory_space<vmem>>, %arg8: memref<1x1x128xf32, #tpu.memory_space<vmem>>) attributes {dimension_semantics = [#tpu.dimension_semantics<parallel>], iteration_bounds = array<i64: 2>, scalar_prefetch = 0 : i64, scratch_operands = 0 : i64, tpu.core_type = #tpu.core_type<tc>, window_params = [{transform_indices = @transform_0, window_bounds = array<i64: 8, 32>}, {pipeline_mode = #tpu.pipeline_mode<synchronous>, transform_indices = @transform_1, window_bounds = array<i64: 32, 128>}, {pipeline_mode = #tpu.pipeline_mode<synchronous>, transform_indices = @transform_2, window_bounds = array<i64: 1, 128>}, {transform_indices = @transform_3, window_bounds = array<i64: 8, 1>}, {transform_indices = @transform_4, window_bounds = array<i64: 8, 1>}, {transform_indices = @transform_5, window_bounds = array<i64: 1, 1, 8>}, {transform_indices = @transform_6, window_bounds = array<i64: 1, 1, 128>}, {transform_indices = @transform_7, window_bounds = array<i64: 1, 1, 128>}]} {
    %c0 = arith.constant 0 : index
    %c0_0 = arith.constant 0 : index
    %0 = vector.load %arg1[%c0, %c0_0] : memref<8x32xf32, #tpu.memory_space<vmem>>, vector<8x32xf32>
    %1 = arith.truncf %0 : vector<8x32xf32> to vector<8x32xbf16>
    %c0_1 = arith.constant 0 : index
    %c0_2 = arith.constant 0 : index
    %2 = vector.load %arg2[%c0_1, %c0_2] : memref<32x128xbf16, #tpu.memory_space<vmem>>, vector<32x128xbf16>
    %cst = arith.constant dense<0.000000e+00> : vector<8x128xf32>
    %3 = tpu.matmul %1, %2, %cst {dimension_numbers = #tpu.dot_dimension_numbers<[1], [0], [0], [1], [0, 0, 1, 1], [], []>} : vector<8x32xbf16>, vector<32x128xbf16>, vector<8x128xf32> -> vector<8x128xf32>
    %c0_3 = arith.constant 0 : index
    %c0_4 = arith.constant 0 : index
    %4 = vector.load %arg3[%c0_3, %c0_4] : memref<1x128xf32, #tpu.memory_space<vmem>>, vector<1x128xf32>
    %5 = vector.broadcast %4 : vector<1x128xf32> to vector<8x128xf32>
    %6 = arith.addf %3, %5 : vector<8x128xf32>
    %7 = tpu.iota {dimensions = array<i32: 1>} : vector<8x128xi32>
    %cst_5 = arith.constant dense<0xFF800000> : vector<8xf32>
    %8 = vector.multi_reduction <maximumf>, %6, %cst_5 [1] : vector<8x128xf32> to vector<8xf32>
    %9 = vector.shape_cast %8 : vector<8xf32> to vector<8x1xf32>
    %10 = vector.broadcast %9 : vector<8x1xf32> to vector<8x128xf32>
    %11 = arith.subf %6, %10 : vector<8x128xf32>
    %12 = math.exp %11 : vector<8x128xf32>
    %cst_6 = arith.constant dense<0.000000e+00> : vector<8xf32>
    %13 = vector.multi_reduction <add>, %12, %cst_6 [1] : vector<8x128xf32> to vector<8xf32>
    %14 = vector.shape_cast %13 : vector<8xf32> to vector<8x1xf32>
    %15 = math.log %14 : vector<8x1xf32>
    %c0_7 = arith.constant 0 : index
    %c0_8 = arith.constant 0 : index
    %16 = vector.load %arg4[%c0_7, %c0_8] : memref<8x1xi32, #tpu.memory_space<vmem>>, vector<8x1xi32>
    %17 = vector.broadcast %16 : vector<8x1xi32> to vector<8x128xi32>
    %18 = arith.cmpi eq, %7, %17 : vector<8x128xi32>
    %cst_9 = arith.constant 0.000000e+00 : f32
    %19 = vector.broadcast %cst_9 : f32 to vector<8x128xf32>
    %20 = arith.select %18, %6, %19 : vector<8x128xi1>, vector<8x128xf32>
    %cst_10 = arith.constant dense<0.000000e+00> : vector<8xf32>
    %21 = vector.multi_reduction <add>, %20, %cst_10 [1] : vector<8x128xf32> to vector<8xf32>
    %22 = vector.shape_cast %21 : vector<8xf32> to vector<8x1xf32>
    %23 = arith.addf %9, %15 : vector<8x1xf32>
    %24 = arith.subf %23, %22 : vector<8x1xf32>
    %c8_i32 = arith.constant 8 : i32
    %25 = arith.muli %arg0, %c8_i32 : i32
    %26 = tpu.iota {dimensions = array<i32: 0>} : vector<8x1xi32>
    %27 = vector.broadcast %25 : i32 to vector<8x1xi32>
    %28 = arith.addi %27, %26 : vector<8x1xi32>
    %c16_i32 = arith.constant 16 : i32
    %29 = vector.broadcast %c16_i32 : i32 to vector<8x1xi32>
    %30 = arith.cmpi slt, %28, %29 : vector<8x1xi32>
    %c0_11 = arith.constant 0 : index
    %c0_12 = arith.constant 0 : index
    %31 = vector.load %arg5[%c0_11, %c0_12] : memref<8x1xi32, #tpu.memory_space<vmem>>, vector<8x1xi32>
    %32 = arith.sitofp %31 : vector<8x1xi32> to vector<8x1xf32>
    %cst_13 = arith.constant 0.000000e+00 : f32
    %33 = vector.broadcast %cst_13 : f32 to vector<8x1xf32>
    %34 = arith.select %30, %32, %33 : vector<8x1xi1>, vector<8x1xf32>
    %35 = arith.mulf %34, %24 : vector<8x1xf32>
    %cst_14 = arith.constant 0.000000e+00 : f32
    %36 = vector.broadcast %cst_14 : f32 to vector<8x1xf32>
    %37 = arith.select %30, %35, %36 : vector<8x1xi1>, vector<8x1xf32>
    %cst_15 = arith.constant dense<0.000000e+00> : vector<1xf32>
    %38 = vector.multi_reduction <add>, %37, %cst_15 [0] : vector<8x1xf32> to vector<1xf32>
    %39 = vector.shape_cast %38 : vector<1xf32> to vector<1x1xf32>
    %40 = vector.shape_cast %39 : vector<1x1xf32> to vector<1x1xf32>
    %41 = vector.broadcast %40 : vector<1x1xf32> to vector<1x128xf32>
    %c0_16 = arith.constant 0 : index
    %c0_17 = arith.constant 0 : index
    %c0_18 = arith.constant 0 : index
    %42 = vector.load %arg7[%c0_16, %c0_17, %c0_18] : memref<1x1x128xf32, #tpu.memory_space<vmem>>, vector<1x1x128xf32>
    %43 = vector.shape_cast %42 : vector<1x1x128xf32> to vector<1x128xf32>
    %44 = vector.shape_cast %41 : vector<1x128xf32> to vector<1x1x128xf32>
    tpu.vector_store %arg7[%c0_16, %c0_17, %c0_18], %44 {strides = array<i32>} : memref<1x1x128xf32, #tpu.memory_space<vmem>>, vector<1x1x128xf32>,
    %cst_19 = arith.constant dense<0.000000e+00> : vector<1xf32>
    %45 = vector.multi_reduction <add>, %34, %cst_19 [0] : vector<8x1xf32> to vector<1xf32>
    %46 = vector.shape_cast %45 : vector<1xf32> to vector<1x1xf32>
    %47 = vector.shape_cast %46 : vector<1x1xf32> to vector<1x1xf32>
    %48 = vector.broadcast %47 : vector<1x1xf32> to vector<1x128xf32>
    %c0_20 = arith.constant 0 : index
    %c0_21 = arith.constant 0 : index
    %c0_22 = arith.constant 0 : index
    %49 = vector.load %arg8[%c0_20, %c0_21, %c0_22] : memref<1x1x128xf32, #tpu.memory_space<vmem>>, vector<1x1x128xf32>
    %50 = vector.shape_cast %49 : vector<1x1x128xf32> to vector<1x128xf32>
    %51 = vector.shape_cast %48 : vector<1x128xf32> to vector<1x1x128xf32>
    tpu.vector_store %arg8[%c0_20, %c0_21, %c0_22], %51 {strides = array<i32>} : memref<1x1x128xf32, #tpu.memory_space<vmem>>, vector<1x1x128xf32>,
    %52 = vector.broadcast %9 : vector<8x1xf32> to vector<8x128xf32>
    %53 = arith.cmpf oeq, %6, %52 : vector<8x128xf32>
    %c128_i32 = arith.constant 128 : i32
    %54 = vector.broadcast %c128_i32 : i32 to vector<8x128xi32>
    %55 = arith.select %53, %7, %54 : vector<8x128xi1>, vector<8x128xi32>
    %cst_23 = arith.constant dense<2147483647> : vector<8xi32>
    %56 = vector.multi_reduction <minsi>, %55, %cst_23 [1] : vector<8x128xi32> to vector<8xi32>
    %57 = vector.shape_cast %56 : vector<8xi32> to vector<8x1xi32>
    %58 = vector.broadcast %57 : vector<8x1xi32> to vector<8x128xi32>
    %59 = arith.cmpi eq, %7, %58 : vector<8x128xi32>
    %60 = arith.extui %59 : vector<8x128xi1> to vector<8x128xi32>
    %61 = arith.sitofp %60 : vector<8x128xi32> to vector<8x128xf32>
    %62 = arith.truncf %61 : vector<8x128xf32> to vector<8x128xbf16>
    %63 = tpu.iota {dimensions = array<i32: 1>} : vector<1x128xi32>
    %64 = arith.sitofp %63 : vector<1x128xi32> to vector<1x128xbf16>
    %cst_24 = arith.constant dense<0.000000e+00> : vector<1x8xf32>
    %65 = tpu.matmul %64, %62, %cst_24 {dimension_numbers = #tpu.dot_dimension_numbers<[1], [1], [0], [0], [0, 0, 1, 0], [], []>} : vector<1x128xbf16>, vector<8x128xbf16>, vector<1x8xf32> -> vector<1x8xf32>
    %66 = arith.fptosi %65 : vector<1x8xf32> to vector<1x8xi32>
    %c0_25 = arith.constant 0 : index
    %c0_26 = arith.constant 0 : index
    %c0_27 = arith.constant 0 : index
    %67 = vector.load %arg6[%c0_25, %c0_26, %c0_27] : memref<1x1x8xi32, #tpu.memory_space<vmem>>, vector<1x1x8xi32>
    %68 = vector.shape_cast %67 : vector<1x1x8xi32> to vector<1x8xi32>
    %69 = vector.shape_cast %66 : vector<1x8xi32> to vector<1x1x8xi32>
    tpu.vector_store %arg6[%c0_25, %c0_26, %c0_27], %69 {strides = array<i32>} : memref<1x1x8xi32, #tpu.memory_space<vmem>>, vector<1x1x8xi32>,
    return
  }
  func.func @transform_0(%arg0: i32) -> (i32, i32) {
    %c0_i32 = arith.constant 0 : i32
    %c0_i32_0 = arith.constant 0 : i32
    return %arg0, %c0_i32 : i32, i32
  }
  func.func @transform_1(%arg0: i32) -> (i32, i32) {
    %c0_i32 = arith.constant 0 : i32
    %c0_i32_0 = arith.constant 0 : i32
    %c0_i32_1 = arith.constant 0 : i32
    return %c0_i32, %c0_i32_0 : i32, i32
  }
  func.func @transform_2(%arg0: i32) -> (i32, i32) {
    %c0_i32 = arith.constant 0 : i32
    %c0_i32_0 = arith.constant 0 : i32
    %c0_i32_1 = arith.constant 0 : i32
    return %c0_i32, %c0_i32_0 : i32, i32
  }
  func.func @transform_3(%arg0: i32) -> (i32, i32) {
    %c0_i32 = arith.constant 0 : i32
    %c0_i32_0 = arith.constant 0 : i32
    return %arg0, %c0_i32 : i32, i32
  }
  func.func @transform_4(%arg0: i32) -> (i32, i32) {
    %c0_i32 = arith.constant 0 : i32
    %c0_i32_0 = arith.constant 0 : i32
    return %arg0, %c0_i32 : i32, i32
  }
  func.func @transform_5(%arg0: i32) -> (i32, i32, i32) {
    %c0_i32 = arith.constant 0 : i32
    %c0_i32_0 = arith.constant 0 : i32
    %c0_i32_1 = arith.constant 0 : i32
    return %arg0, %c0_i32, %c0_i32_0 : i32, i32, i32
  }
  func.func @transform_6(%arg0: i32) -> (i32, i32, i32) {
    %c0_i32 = arith.constant 0 : i32
    %c0_i32_0 = arith.constant 0 : i32
    %c0_i32_1 = arith.constant 0 : i32
    return %arg0, %c0_i32, %c0_i32_0 : i32, i32, i32
  }
  func.func @transform_7(%arg0: i32) -> (i32, i32, i32) {
    %c0_i32 = arith.constant 0 : i32
    %c0_i32_0 = arith.constant 0 : i32
    %c0_i32_1 = arith.constant 0 : i32
    return %arg0, %c0_i32, %c0_i32_0 : i32, i32, i32
  }
}

</mosaic_0001>

<llo_original>
// kernel: ner_tagger_forward.1
$region0: #{ner_tagger_forward.1}
  #allocation0 [shape = 'u32[]', space=smem, size = 0x4, offset = 0x4, fixed_abs, tag = 'smem constant byte address 0x4 - core index']
  #allocation1 [shape = 'u32[72,128]{1,0:T(1,128)}', space=vmem, size = 0x9000, scoped, tag = 'internal scratch']
  %s0 = inlined_call_operand.vmem [shape: f32[16,32], index: 0, kind: input, shape index: {}]
  %s1 = inlined_call_operand.vmem [shape: bf16[32,128], index: 1, kind: input, shape index: {}]
  %s2 = inlined_call_operand.vmem [shape: f32[1,128], index: 2, kind: input, shape index: {}]
  %s3 = inlined_call_operand.vmem [shape: s32[16,1], index: 3, kind: input, shape index: {}]
  %s4 = inlined_call_operand.vmem [shape: s32[16,1], index: 4, kind: input, shape index: {}]
  %s5 = inlined_call_operand.vmem [shape: s32[2,1,8], index: 5, kind: output, shape index: {0}]
  %s6 = inlined_call_operand.vmem [shape: f32[2,1,128], index: 6, kind: output, shape index: {1}]
  %s7 = inlined_call_operand.vmem [shape: f32[2,1,128], index: 7, kind: output, shape index: {2}]
  %8 = xla_tuple %s5, %s6, %s7
  %s9 = sld [smem:[#allocation0]]
  $region69: #{ner_tagger_forward.1} parent=0
    _
  %s11 = ssub.s32 1, %s9
  %s12 = scalar_select 0, %s11, %s9
  loop: start=0, step=1, limit=4
  $region2: #{ner_tagger_forward.1} parent=0 // loop_pre_header
    _
  $region3: #{ner_tagger_forward.1} parent=0 // loop_header
    %s14 = sphi 0, %s18
    %p15 = scmp.ge.s32.totalorder %s14, 4
    %s24 = sphi 0, %s26
    %s27 = sphi 0, %s24
    %s28 = sphi 0, %s27
    %s44 = sphi 0, %s28
    %s48 = sphi 0, %s48
    %s50 = sphi 0, %s48
    %s51 = sphi 0, %s50
    %s65 = sphi 0, %s51
    %s69 = sphi 0, %s69
    %s71 = sphi 0, %s69
    %s72 = sphi 0, %s71
    %s86 = sphi 0, %s72
    %s92 = sphi 0, %s94
    %s95 = sphi 0, %s92
    %s96 = sphi 0, %s95
    %s112 = sphi 0, %s96
    %s118 = sphi 0, %s120
    %s121 = sphi 0, %s118
    %s122 = sphi 0, %s121
    %s138 = sphi 0, %s122
    %s144 = sphi 0, %s146
    %s147 = sphi 0, %s144
    %s148 = sphi 0, %s147
    %s164 = sphi 0, %s148
    %s170 = sphi 0, %s172
    %s173 = sphi 0, %s170
    %s174 = sphi 0, %s173
    %s190 = sphi 0, %s174
    %s196 = sphi 0, %s198
    %s199 = sphi 0, %s196
    %s200 = sphi 0, %s199
    %s216 = sphi 0, %s200
  $region4: #{ner_tagger_forward.1} parent=0 // loop_header_branch
    %17 = sbr.rel (%p15) target = $region8
  $region5: #{ner_tagger_forward.1} parent=0 // loop_body
    %s19 = ssub.s32 %s14, 1
    %s20 = ssub.s32 %s14, 2
    %s21 = sadd.s32 %s14, 1
    %s22 = ssub.s32 %s14, %s21
    %p23 = scmp.eq.s32.totalorder %s22, 0
    %s25 = sadd.s32 %s24, 1
    %s26 = scalar_select %p23, %s24, %s25
    %p29 = pneg %p23
    %p30 = scmp.eq.s32.totalorder %s14, 1
    %p31 = por %p29, %p30
    %p32 = scmp.ne.s32.totalorder %s24, %s27
    %p33 = scmp.eq.s32.totalorder %s14, 0
    %p34 = por %p32, %p33
    %p35 = scmp.ne.s32.totalorder %s24, %s27
    %p36 = scmp.eq.s32.totalorder %s19, 1
    %p37 = por %p35, %p36
    %p38 = scmp.ne.s32.totalorder %s27, %s28
    %p39 = scmp.eq.s32.totalorder %s19, 0
    %p40 = por %p38, %p39
    %p41 = scmp.ne.s32.totalorder %s27, %s28
    %p42 = scmp.eq.s32.totalorder %s20, 1
    %p43 = por %p41, %p42
    %p45 = scmp.ne.s32.totalorder %s28, %s44
    %p46 = scmp.eq.s32.totalorder %s20, 0
    %p47 = por %p45, %p46
    %s49 = sadd.s32 %s48, 1
    %p52 = scmp.eq.s32.totalorder %s14, 1
    %p53 = scmp.ne.s32.totalorder %s48, %s50
    %p54 = scmp.eq.s32.totalorder %s14, 0
    %p55 = por %p53, %p54
    %p56 = scmp.ne.s32.totalorder %s48, %s50
    %p57 = scmp.eq.s32.totalorder %s19, 1
    %p58 = por %p56, %p57
    %p59 = scmp.ne.s32.totalorder %s50, %s51
    %p60 = scmp.eq.s32.totalorder %s19, 0
    %p61 = por %p59, %p60
    %p62 = scmp.ne.s32.totalorder %s50, %s51
    %p63 = scmp.eq.s32.totalorder %s20, 1
    %p64 = por %p62, %p63
    %p66 = scmp.ne.s32.totalorder %s51, %s65
    %p67 = scmp.eq.s32.totalorder %s20, 0
    %p68 = por %p66, %p67
    %s70 = sadd.s32 %s69, 1
    %p73 = scmp.eq.s32.totalorder %s14, 1
    %p74 = scmp.ne.s32.totalorder %s69, %s71
    %p75 = scmp.eq.s32.totalorder %s14, 0
    %p76 = por %p74, %p75
    %p77 = scmp.ne.s32.totalorder %s69, %s71
    %p78 = scmp.eq.s32.totalorder %s19, 1
    %p79 = por %p77, %p78
    %p80 = scmp.ne.s32.totalorder %s71, %s72
    %p81 = scmp.eq.s32.totalorder %s19, 0
    %p82 = por %p80, %p81
    %p83 = scmp.ne.s32.totalorder %s71, %s72
    %p84 = scmp.eq.s32.totalorder %s20, 1
    %p85 = por %p83, %p84
    %p87 = scmp.ne.s32.totalorder %s72, %s86
    %p88 = scmp.eq.s32.totalorder %s20, 0
    %p89 = por %p87, %p88
    %s90 = ssub.s32 %s14, %s21
    %p91 = scmp.eq.s32.totalorder %s90, 0
    %s93 = sadd.s32 %s92, 1
    %s94 = scalar_select %p91, %s92, %s93
    %p97 = pneg %p91
    %p98 = scmp.eq.s32.totalorder %s14, 1
    %p99 = por %p97, %p98
    %p100 = scmp.ne.s32.totalorder %s92, %s95
    %p101 = scmp.eq.s32.totalorder %s14, 0
    %p102 = por %p100, %p101
    %p103 = scmp.ne.s32.totalorder %s92, %s95
    %p104 = scmp.eq.s32.totalorder %s19, 1
    %p105 = por %p103, %p104
    %p106 = scmp.ne.s32.totalorder %s95, %s96
    %p107 = scmp.eq.s32.totalorder %s19, 0
    %p108 = por %p106, %p107
    %p109 = scmp.ne.s32.totalorder %s95, %s96
    %p110 = scmp.eq.s32.totalorder %s20, 1
    %p111 = por %p109, %p110
    %p113 = scmp.ne.s32.totalorder %s96, %s112
    %p114 = scmp.eq.s32.totalorder %s20, 0
    %p115 = por %p113, %p114
    %s116 = ssub.s32 %s14, %s21
    %p117 = scmp.eq.s32.totalorder %s116, 0
    %s119 = sadd.s32 %s118, 1
    %s120 = scalar_select %p117, %s118, %s119
    %p123 = pneg %p117
    %p124 = scmp.eq.s32.totalorder %s14, 1
    %p125 = por %p123, %p124
    %p126 = scmp.ne.s32.totalorder %s118, %s121
    %p127 = scmp.eq.s32.totalorder %s14, 0
    %p128 = por %p126, %p127
    %p129 = scmp.ne.s32.totalorder %s118, %s121
    %p130 = scmp.eq.s32.totalorder %s19, 1
    %p131 = por %p129, %p130
    %p132 = scmp.ne.s32.totalorder %s121, %s122
    %p133 = scmp.eq.s32.totalorder %s19, 0
    %p134 = por %p132, %p133
    %p135 = scmp.ne.s32.totalorder %s121, %s122
    %p136 = scmp.eq.s32.totalorder %s20, 1
    %p137 = por %p135, %p136
    %p139 = scmp.ne.s32.totalorder %s122, %s138
    %p140 = scmp.eq.s32.totalorder %s20, 0
    %p141 = por %p139, %p140
    %s142 = ssub.s32 %s14, %s21
    %p143 = scmp.eq.s32.totalorder %s142, 0
    %s145 = sadd.s32 %s144, 1
    %s146 = scalar_select %p143, %s144, %s145
    %p149 = pneg %p143
    %p150 = scmp.eq.s32.totalorder %s14, 1
    %p151 = por %p149, %p150
    %p152 = scmp.ne.s32.totalorder %s144, %s147
    %p153 = scmp.eq.s32.totalorder %s14, 0
    %p154 = por %p152, %p153
    %p155 = scmp.ne.s32.totalorder %s144, %s147
    %p156 = scmp.eq.s32.totalorder %s19, 1
    %p157 = por %p155, %p156
    %p158 = scmp.ne.s32.totalorder %s147, %s148
    %p159 = scmp.eq.s32.totalorder %s19, 0
    %p160 = por %p158, %p159
    %p161 = scmp.ne.s32.totalorder %s147, %s148
    %p162 = scmp.eq.s32.totalorder %s20, 1
    %p163 = por %p161, %p162
    %p165 = scmp.ne.s32.totalorder %s148, %s164
    %p166 = scmp.eq.s32.totalorder %s20, 0
    %p167 = por %p165, %p166
    %s168 = ssub.s32 %s14, %s21
    %p169 = scmp.eq.s32.totalorder %s168, 0
    %s171 = sadd.s32 %s170, 1
    %s172 = scalar_select %p169, %s170, %s171
    %p175 = pneg %p169
    %p176 = scmp.eq.s32.totalorder %s14, 1
    %p177 = por %p175, %p176
    %p178 = scmp.ne.s32.totalorder %s170, %s173
    %p179 = scmp.eq.s32.totalorder %s14, 0
    %p180 = por %p178, %p179
    %p181 = scmp.ne.s32.totalorder %s170, %s173
    %p182 = scmp.eq.s32.totalorder %s19, 1
    %p183 = por %p181, %p182
    %p184 = scmp.ne.s32.totalorder %s173, %s174
    %p185 = scmp.eq.s32.totalorder %s19, 0
    %p186 = por %p184, %p185
    %p187 = scmp.ne.s32.totalorder %s173, %s174
    %p188 = scmp.eq.s32.totalorder %s20, 1
    %p189 = por %p187, %p188
    %p191 = scmp.ne.s32.totalorder %s174, %s190
    %p192 = scmp.eq.s32.totalorder %s20, 0
    %p193 = por %p191, %p192
    %s194 = ssub.s32 %s14, %s21
    %p195 = scmp.eq.s32.totalorder %s194, 0
    %s197 = sadd.s32 %s196, 1
    %s198 = scalar_select %p195, %s196, %s197
    %p201 = pneg %p195
    %p202 = scmp.eq.s32.totalorder %s14, 1
    %p203 = por %p201, %p202
    %p204 = scmp.ne.s32.totalorder %s196, %s199
    %p205 = scmp.eq.s32.totalorder %s14, 0
    %p206 = por %p204, %p205
    %p207 = scmp.ne.s32.totalorder %s196, %s199
    %p208 = scmp.eq.s32.totalorder %s19, 1
    %p209 = por %p207, %p208
    %p210 = scmp.ne.s32.totalorder %s199, %s200
    %p211 = scmp.eq.s32.totalorder %s19, 0
    %p212 = por %p210, %p211
    %p213 = scmp.ne.s32.totalorder %s199, %s200
    %p214 = scmp.eq.s32.totalorder %s20, 1
    %p215 = por %p213, %p214
    %p217 = scmp.ne.s32.totalorder %s200, %s216
    %p218 = scmp.eq.s32.totalorder %s20, 0
    %p219 = por %p217, %p218
    %p220 = scmp.le.s32.totalorder 1, %s14
    %p221 = scmp.lt.s32.totalorder %s14, 3
    %p222 = pnand %p220, %p221
    %p223 = pneg %p222
    // Predicated region
    $region9: #{ner_tagger_forward.1} parent=5 // pred_check
      _
    $region10: #{ner_tagger_forward.1} parent=5 // pred_check_branch
      %225 = sbr.rel (%p222) target = $region12
    $region11: #{ner_tagger_forward.1} parent=5 // pred_region
      %s226 = ssub.s32 %s14, 1
      // Predicated region
      $region13: #{ner_tagger_forward.1} parent=11 // pred_check
        %p227 = pneg %p61
      $region14: #{ner_tagger_forward.1} parent=11 // pred_check_branch
        %229 = sbr.rel (%p227) target = $region16
      $region15: #{ner_tagger_forward.1} parent=11 // pred_region
        _
      $region16: #{ner_tagger_forward.1} parent=11 // pred_fallthru
        _
      // Predicated region
      $region17: #{ner_tagger_forward.1} parent=11 // pred_check
        %p230 = pneg %p82
      $region18: #{ner_tagger_forward.1} parent=11 // pred_check_branch
        %232 = sbr.rel (%p230) target = $region20
      $region19: #{ner_tagger_forward.1} parent=11 // pred_region
        _
      $region20: #{ner_tagger_forward.1} parent=11 // pred_fallthru
        _
    $region12: #{ner_tagger_forward.1} parent=5 // pred_fallthru
      _
    %p233 = scmp.lt.s32.totalorder %s14, 2
    // Predicated region
    $region21: #{ner_tagger_forward.1} parent=5 // pred_check
      %p234 = pneg %p233
    $region22: #{ner_tagger_forward.1} parent=5 // pred_check_branch
      %236 = sbr.rel (%p234) target = $region24
    $region23: #{ner_tagger_forward.1} parent=5 // pred_region
      // Predicated region
      $region25: #{ner_tagger_forward.1} parent=23 // pred_check
        %p237 = pneg %p34
      $region26: #{ner_tagger_forward.1} parent=23 // pred_check_branch
        %239 = sbr.rel (%p237) target = $region28
      $region27: #{ner_tagger_forward.1} parent=23 // pred_region
        %p240 = scmp.lt.s32.totalorder %s14, 1
        %s241 = scalar_select %p240, %s14, 1
        %s242 = smul.addr %s241, 8
        %s243 = scalar_lea.vmem %s0, %s242
      $region28: #{ner_tagger_forward.1} parent=23 // pred_fallthru
        _
      // Predicated region
      $region29: #{ner_tagger_forward.1} parent=23 // pred_check
        %p244 = pneg %p102
      $region30: #{ner_tagger_forward.1} parent=23 // pred_check_branch
        %246 = sbr.rel (%p244) target = $region32
      $region31: #{ner_tagger_forward.1} parent=23 // pred_region
        %p247 = scmp.lt.s32.totalorder %s14, 1
        %s248 = scalar_select %p247, %s14, 1
        %s249 = smul.addr %s248, 8
        %s250 = scalar_lea.vmem %s3, %s249
      $region32: #{ner_tagger_forward.1} parent=23 // pred_fallthru
        _
      // Predicated region
      $region33: #{ner_tagger_forward.1} parent=23 // pred_check
        %p251 = pneg %p128
      $region34: #{ner_tagger_forward.1} parent=23 // pred_check_branch
        %253 = sbr.rel (%p251) target = $region36
      $region35: #{ner_tagger_forward.1} parent=23 // pred_region
        %p254 = scmp.lt.s32.totalorder %s14, 1
        %s255 = scalar_select %p254, %s14, 1
        %s256 = smul.addr %s255, 8
        %s257 = scalar_lea.vmem %s4, %s256
      $region36: #{ner_tagger_forward.1} parent=23 // pred_fallthru
        _
    $region24: #{ner_tagger_forward.1} parent=5 // pred_fallthru
      _
    %p258 = scmp.le.s32.totalorder 1, %s14
    %p259 = scmp.lt.s32.totalorder %s14, 3
    %p260 = pnand %p258, %p259
    %p261 = pneg %p260
    // Predicated region
    $region37: #{ner_tagger_forward.1} parent=5 // pred_check
      _
    $region38: #{ner_tagger_forward.1} parent=5 // pred_check_branch
      %263 = sbr.rel (%p260) target = $region40
    $region39: #{ner_tagger_forward.1} parent=5 // pred_region
      %s264 = ssub.s32 %s14, 1
      %p265 = scmp.lt.s32.totalorder %s19, 1
      %s266 = scalar_select %p265, %s19, 1
      %s267 = smul.addr %s266, 8
      %s268 = scalar_lea.vmem %s0, %s267
      %p269 = pneg %p40
      %p270 = pneg %p37
      %p271 = pneg %p61
      %p272 = pneg %p58
      %p273 = pneg %p82
      %p274 = pneg %p79
      %p275 = scmp.lt.s32.totalorder %s19, 1
      %s276 = scalar_select %p275, %s19, 1
      %s277 = smul.addr %s276, 8
      %s278 = scalar_lea.vmem %s3, %s277
      %p279 = pneg %p108
      %p280 = pneg %p105
      %p281 = scmp.lt.s32.totalorder %s19, 1
      %s282 = scalar_select %p281, %s19, 1
      %s283 = smul.addr %s282, 8
      %s284 = scalar_lea.vmem %s4, %s283
      %p285 = pneg %p134
      %p286 = pneg %p131
      %p287 = pneg %p160
      %p288 = pneg %p157
      %p289 = scmp.lt.s32.totalorder %s19, 1
      %s290 = scalar_select %p289, %s19, 1
      %s291 = scalar_lea.vmem %s5, %s290
      %p292 = pneg %p186
      %p293 = pneg %p183
      %p294 = scmp.lt.s32.totalorder %s19, 1
      %s295 = scalar_select %p294, %s19, 1
      %s296 = scalar_lea.vmem %s6, %s295
      %p297 = pneg %p212
      %p298 = pneg %p209
      %p299 = scmp.lt.s32.totalorder %s19, 1
      %s300 = scalar_select %p299, %s19, 1
      %s301 = scalar_lea.vmem %s7, %s300
      %p302 = scmp.lt.s32.totalorder %s19, 1
      %s303 = scalar_select %p302, %s19, 1
      %s304 = smul.addr %s303, 8
      %s305 = scalar_lea.vmem %s0, %s304
      %p306 = scmp.lt.s32.totalorder %s19, 1
      %s307 = scalar_select %p306, %s19, 1
      %s308 = smul.addr %s307, 8
      %s309 = scalar_lea.vmem %s3, %s308
      %p310 = scmp.lt.s32.totalorder %s19, 1
      %s311 = scalar_select %p310, %s19, 1
      %s312 = smul.addr %s311, 8
      %s313 = scalar_lea.vmem %s4, %s312
      %p314 = scmp.lt.s32.totalorder %s19, 1
      %s315 = scalar_select %p314, %s19, 1
      %s316 = scalar_lea.vmem %s5, %s315
      %p317 = scmp.lt.s32.totalorder %s19, 1
      %s318 = scalar_select %p317, %s19, 1
      %s319 = scalar_lea.vmem %s6, %s318
      %p320 = scmp.lt.s32.totalorder %s19, 1
      %s321 = scalar_select %p320, %s19, 1
      %s322 = scalar_lea.vmem %s7, %s321
      %v324 = vld [vmem:[%s305] sm:$0xff]
      %v325 = vpack.c.bf16 %v324, %v324
      %v326 = vld [vmem:[%s1] sm:$0xf]
      %v327 = vld [vmem:[%s1 + $0x4] sm:$0xf]
      %v328 = vld [vmem:[%s1 + $0x8] sm:$0xf]
      %v329 = vld [vmem:[%s1 + $0xc] sm:$0xf]
      %v330 = vld [vmem:[%s2] sm:$0x1]
      %v332 = vperm.slane %v330, 0
      %v338 = vunpack.c.l.b16 %v326
      %v339 = vunpack.c.l.b16 %v327
      %v340 = vunpack.c.l.b16 %v328
      %v341 = vunpack.c.l.b16 %v329
      %v342 = vpack.c.b16 %v339, %v338
      %v343 = vpack.c.b16 %v341, %v340
      %vm346 = vcmask 261120
      %v348 = vsel %vm346, %v325, 0
      %350 = vmatpush.bf16.msra.mxu0 0
      %351 = vmatpush.bf16.msra.mxu0 0
      %352 = vmatpush.bf16.msra.mxu0 0
      %353 = vmatpush.bf16.msra.mxu0 0
      %354 = vmatpush.bf16.msra.mxu0 0
      %355 = vmatpush.bf16.msra.mxu0 0
      %356 = vmatpush.bf16.msra.mxu0 %v343
      %357 = vmatpush.bf16.msra.mxu0 %v342
      %358 = vmatmul.bf16.gmra.mxu0 %v348
      %v359 = vpop.f32.mrf.mxu0
      %v360 = vadd.f32 %v332, %v359
      %v361 = vpop.f32.mrf.mxu0
      %362 = vdwg.mxu0
      %v363 = vlaneseq
      %v364 = vand.u32 %v363, 127
      %365 = vmax.xlane.f32.xlu0 %v360
      %v366 = vpop.xlane.xlu0 %365
      %v367 = vsub.f32 %v360, %v366
      %v368 = vmul.f32 %v367, 1.442695
      %v369 = vpow.pop %v368
      %370 = vadd.xlane.f32.xlu0 %v369
      %v371 = vpop.xlane.xlu0 %370
      %v372 = vlog2.pop %v371
      %v373 = vmul.f32 %v372, 0.6931472
      %v374 = vld [vmem:[%s309] sm:$0xff]
      %375 = vset.pattern.permute.xlu0 0
      %376 = vperm.xlu0 %375, %v374
      %v377 = vpop.permute.xlu0 %376
      %vm378 = vcmp.eq.s32.totalorder %v364, %v377
      %v379 = vsel %vm378, %v360, 0.0
      %380 = vadd.xlane.f32.xlu0 %v379
      %v381 = vpop.xlane.xlu0 %380
      %v382 = vadd.f32 %v366, %v373
      %v383 = vsub.f32 %v382, %v381
      %s384 = smul.u32 %s19, 8
      %v385 = vlaneseq
      %v386 = vshrl.u32 %v385, 7
      %v387 = vstv %s384
      %v388 = vadd.s32 %v387, %v386
      %vm389 = vcmp.lt.s32.totalorder %v388, 16
      %v390 = vld [vmem:[%s313] sm:$0xff]
      %v391 = vcvt.s32.f32 %v390
      %v392 = vsel %vm389, %v391, 0.0
      %v393 = vmul.f32 %v392, %v383
      %v394 = vsel %vm389, %v393, 0.0
      %vm395 = vcmask 7168
      %v396 = vsel %vm395, %v394, 0.0
      %v397 = vrot.slane %v396, 4
      %v398 = vadd.f32 %v396, %v397
      %v399 = vrot.slane %v398, 2
      %v400 = vadd.f32 %v398, %v399
      %v401 = vrot.slane %v400, 1
      %v402 = vadd.f32 %v400, %v401
      %404 = vset.pattern.permute.xlu0 0
      %405 = vperm.xlu0 %404, %v402
      %v406 = vpop.permute.xlu0 %405
      %408 = vst [vmem:[%s319] sm:$0x1] %v406
      %v409 = vsel %vm395, %v392, 0.0
      %v410 = vrot.slane %v409, 4
      %v411 = vadd.f32 %v409, %v410
      %v412 = vrot.slane %v411, 2
      %v413 = vadd.f32 %v411, %v412
      %v414 = vrot.slane %v413, 1
      %v415 = vadd.f32 %v413, %v414
      %417 = vset.pattern.permute.xlu0 0
      %418 = vperm.xlu0 %417, %v415
      %v419 = vpop.permute.xlu0 %418
      %421 = vst [vmem:[%s322] sm:$0x1] %v419
      %vm422 = vcmp.eq.f32.partialorder %v360, %v366
      %v423 = vsel %vm422, %v364, 128
      %v424 = vand.u32 %v423, 65535
      %v425 = vshra.s32 %v423, 16
      %v426 = vcvt.s32.f32 %v424
      %v427 = vcvt.s32.f32 %v425
      %428 = vmin.xlane.f32.xlu0 %v427
      %v429 = vpop.xlane.xlu0 %428
      %vm430 = vcmp.eq.f32.partialorder %v427, %v429
      %v431 = vsel %vm430, %v426, inf
      %432 = vmin.xlane.f32.xlu0 %v431
      %v433 = vpop.xlane.xlu0 %432
      %v434 = vcvt.f32.s32 %v433
      %v435 = vcvt.f32.s32 %v429
      %v436 = vshll.u32 %v435, 16
      %v437 = vadd.s32 %v436, %v434
      %vm438 = vcmp.eq.s32.totalorder %v364, %v437
      %v439 = vsel %vm438, 1, 0
      %v440 = vcvt.s32.f32 %v439
      %v441 = vpack.c.bf16 %v440, %v440
      %v442 = vcvt.s32.f32 %v364
      %v443 = vpack.c.bf16 %v442, %v442
      %444 = vmatpush.bf16.xpose.msra.mxu0 0
      %445 = vmatpush.bf16.xpose.msra.mxu0 0
      %446 = vmatpush.bf16.xpose.msra.mxu0 0
      %447 = vmatpush.bf16.xpose.msra.mxu0 0
      %448 = vmatpush.bf16.xpose.msra.mxu0 0
      %449 = vmatpush.bf16.xpose.msra.mxu0 0
      %450 = vmatpush.bf16.xpose.msra.mxu0 0
      %451 = vmatpush.bf16.xpose.msra.mxu0 %v441
      %452 = vmatmul.bf16.gmra.mxu0 %v443
      %v453 = vpop.f32.mrf.mxu0
      %v454 = vadd.f32 0.0, %v453
      %v455 = vpop.f32.mrf.mxu0
      %456 = vdwg.mxu0
      %v457 = vcvt.f32.s32.to.zero.pseudo %v454
      %vm458 = vcmask 57344
      %459 = vst.msk [vmem:[%s316] sm:$0x1] %vm458, %v457
      %p460 = scmp.lt.s32.totalorder %s19, 1
      %s461 = scalar_select %p460, %s19, 1
      %s462 = scalar_lea.vmem %s5, %s461
      %p463 = scmp.lt.s32.totalorder %s19, 1
      %s464 = scalar_select %p463, %s19, 1
      %s465 = scalar_lea.vmem %s6, %s464
      %p466 = scmp.lt.s32.totalorder %s19, 1
      %s467 = scalar_select %p466, %s19, 1
      %s468 = scalar_lea.vmem %s7, %s467
      // Predicated region
      $region41: #{ner_tagger_forward.1} parent=39 // pred_check
        %p469 = pneg %p157
      $region42: #{ner_tagger_forward.1} parent=39 // pred_check_branch
        %471 = sbr.rel (%p469) target = $region44
      $region43: #{ner_tagger_forward.1} parent=39 // pred_region
        _
      $region44: #{ner_tagger_forward.1} parent=39 // pred_fallthru
        _
      // Predicated region
      $region45: #{ner_tagger_forward.1} parent=39 // pred_check
        %p472 = pneg %p183
      $region46: #{ner_tagger_forward.1} parent=39 // pred_check_branch
        %474 = sbr.rel (%p472) target = $region48
      $region47: #{ner_tagger_forward.1} parent=39 // pred_region
        _
      $region48: #{ner_tagger_forward.1} parent=39 // pred_fallthru
        _
      // Predicated region
      $region49: #{ner_tagger_forward.1} parent=39 // pred_check
        %p475 = pneg %p209
      $region50: #{ner_tagger_forward.1} parent=39 // pred_check_branch
        %477 = sbr.rel (%p475) target = $region52
      $region51: #{ner_tagger_forward.1} parent=39 // pred_region
        _
      $region52: #{ner_tagger_forward.1} parent=39 // pred_fallthru
        _
    $region40: #{ner_tagger_forward.1} parent=5 // pred_fallthru
      _
    %p478 = scmp.le.s32.totalorder 2, %s14
    // Predicated region
    $region53: #{ner_tagger_forward.1} parent=5 // pred_check
      %p479 = pneg %p478
    $region54: #{ner_tagger_forward.1} parent=5 // pred_check_branch
      %481 = sbr.rel (%p479) target = $region56
    $region55: #{ner_tagger_forward.1} parent=5 // pred_region
      %s482 = ssub.s32 %s14, 2
      // Predicated region
      $region57: #{ner_tagger_forward.1} parent=55 // pred_check
        %p483 = pneg %p163
      $region58: #{ner_tagger_forward.1} parent=55 // pred_check_branch
        %485 = sbr.rel (%p483) target = $region60
      $region59: #{ner_tagger_forward.1} parent=55 // pred_region
        %p486 = scmp.lt.s32.totalorder %s20, 1
        %s487 = scalar_select %p486, %s20, 1
        %s488 = scalar_lea.vmem %s5, %s487
      $region60: #{ner_tagger_forward.1} parent=55 // pred_fallthru
        _
      // Predicated region
      $region61: #{ner_tagger_forward.1} parent=55 // pred_check
        %p489 = pneg %p189
      $region62: #{ner_tagger_forward.1} parent=55 // pred_check_branch
        %491 = sbr.rel (%p489) target = $region64
      $region63: #{ner_tagger_forward.1} parent=55 // pred_region
        %p492 = scmp.lt.s32.totalorder %s20, 1
        %s493 = scalar_select %p492, %s20, 1
        %s494 = scalar_lea.vmem %s6, %s493
      $region64: #{ner_tagger_forward.1} parent=55 // pred_fallthru
        _
      // Predicated region
      $region65: #{ner_tagger_forward.1} parent=55 // pred_check
        %p495 = pneg %p215
      $region66: #{ner_tagger_forward.1} parent=55 // pred_check_branch
        %497 = sbr.rel (%p495) target = $region68
      $region67: #{ner_tagger_forward.1} parent=55 // pred_region
        %p498 = scmp.lt.s32.totalorder %s20, 1
        %s499 = scalar_select %p498, %s20, 1
        %s500 = scalar_lea.vmem %s7, %s499
      $region68: #{ner_tagger_forward.1} parent=55 // pred_fallthru
        _
    $region56: #{ner_tagger_forward.1} parent=5 // pred_fallthru
      _
  $region6: #{ner_tagger_forward.1} parent=0 // loop_footer
    %s18 = sadd.s32 1, %s14
  $region7: #{ner_tagger_forward.1} parent=0 // loop_footer_branch
    %13 = sbr.rel target = $region3
  $region8: #{ner_tagger_forward.1} parent=0 // loop_exit
    _

</llo_original>
